<compile_context>
chip_gen: v7x
topology: tpu7x:2x2x1
jax: 0.10.0
libtpu: 0.0.40
codegen_flags: <defaults>
</compile_context>

<pallas_src>
import functools
import math

import jax
import jax.numpy as jnp
from jax.experimental import pallas as pl
from jax.experimental.pallas import tpu as pltpu


def _dice_sums_kernel(p_ref, t_ref, out_ref, num_acc, den_acc,
                      *, p_exp, cols, td, aw, inner_ct, ragged):
    """Accumulate per-row sum(p*t) and sum(p^p + t^p) over column tiles.

    Grid = (shard, row_tile, col_tile); the innermost axis is the reduction.
    Emits a lane-dense (1, tr, 128) f32 block per (shard, row_tile):
    lane 0 = numerator sum, lane 1 = denominator sum.
    """
    s = pl.program_id(0)
    ci = pl.program_id(2)

    tr = num_acc.shape[0]
    n_chunks = td // aw

    @pl.when(ci == 0)
    def _init():
        num_acc[...] = jnp.zeros_like(num_acc)
        den_acc[...] = jnp.zeros_like(den_acc)

    # Global column offset of this tile (shard-aware).
    col_base = (s * inner_ct + ci) * td

    def _terms(ps, ts):
        ps = ps.astype(jnp.float32)
        ts = ts.astype(jnp.float32)
        prod = ps * ts
        if p_exp == 2:
            dterm = ps * ps + ts * ts
        elif p_exp == 1:
            dterm = ps + ts
        else:
            dterm = ps ** p_exp + ts ** p_exp
        return prod, dterm

    def _accumulate(masked):
        lane = (jax.lax.broadcasted_iota(jnp.int32, (tr, aw), 1)
                if masked else None)

        def one_chunk(c, off, carry):
            nacc, dacc = carry
            prod, dterm = _terms(p_ref[:, pl.ds(off, aw)],
                                 t_ref[:, pl.ds(off, aw)])
            if masked:
                # Columns at/after `cols` are out of bounds (partial last
                # block and/or ghost shard tile): discard via SELECT so
                # stale-VMEM NaN/Inf cannot leak into the sums.
                rem = cols - col_base - c * aw
                valid = lane < rem
                prod = jnp.where(valid, prod, 0.0)
                dterm = jnp.where(valid, dterm, 0.0)
            return nacc + prod, dacc + dterm

        init = (jnp.zeros((tr, aw), jnp.float32),
                jnp.zeros((tr, aw), jnp.float32))
        if n_chunks <= 8:
            carry = init
            for c in range(n_chunks):            # short: fully unrolled
                carry = one_chunk(c, c * aw, carry)
        else:
            def body(c, carry):
                off = pl.multiple_of(c * aw, aw)
                return one_chunk(c, off, carry)
            carry = jax.lax.fori_loop(0, n_chunks, body, init, unroll=4)

        nacc, dacc = carry
        # One scratch round-trip per grid step (not per chunk).
        num_acc[...] += nacc
        den_acc[...] += dacc

    if ragged:
        @pl.when(col_base + td <= cols)
        def _full_tile():
            _accumulate(False)

        @pl.when(col_base + td > cols)
        def _tail_tile():
            _accumulate(True)
    else:
        _accumulate(False)

    @pl.when(ci == pl.num_programs(2) - 1)
    def _finalize():
        nsum = jnp.sum(num_acc[...], axis=1, keepdims=True)   # (tr, 1)
        dsum = jnp.sum(den_acc[...], axis=1, keepdims=True)   # (tr, 1)
        lane = jax.lax.broadcasted_iota(jnp.int32, (tr, 128), 1)
        packed = jnp.where(lane == 0, nsum, jnp.where(lane == 1, dsum, 0.0))
        out_ref[...] = packed[None, :, :]


def _vmem_capacity_bytes(default_bytes=64 * 1024 * 1024):
    """Generation-aware VMEM capacity; conservative 64 MiB (v7x per-TC) fallback."""
    try:
        info = pltpu.get_tpu_info()
        cap = getattr(info, "vmem_capacity_bytes", None)
        if cap:
            return int(cap)
    except Exception:
        pass
    return default_bytes


def _num_tensorcores():
    """v7x exposes 2 TensorCores per chip; older generations treated as 1."""
    try:
        kind = str(getattr(jax.devices()[0], "device_kind", "")).lower()
        if "7" in kind:
            return 2
    except Exception:
        pass
    return 1


def binary_dice_loss(predict, target, *, smooth=1.0, p=2, reduction="mean"):
    """JAX/Pallas equivalent of BinaryDiceLoss.forward."""
    assert predict.shape[0] == target.shape[0], \
        "predict & target batch size don't match"
    if reduction not in ("mean", "sum", "none"):
        raise Exception("Unexpected reduction {}".format(reduction))

    n = predict.shape[0]
    pr = predict.reshape(n, -1)
    tg = target.reshape(n, -1)
    d = pr.shape[1]

    # Use an integer exponent when possible so the kernel lowers to multiplies,
    # not exp(p*log(x)) on the EUP.
    p_exp = p
    if isinstance(p_exp, float) and p_exp.is_integer():
        p_exp = int(p_exp)

    p_item = jnp.dtype(pr.dtype).itemsize
    t_item = jnp.dtype(tg.dtype).itemsize
    # Native sublane tile of the narrower input dtype (f32: 8, bf16: 16, i8: 32).
    sub = 8 * max(1, 4 // max(1, min(p_item, t_item)))

    # --- Sublane packing for small batch: (N, D) -> (N*rp, D/rp), free reshape.
    rp = 1
    if n % sub != 0 and d >= 256:
        need = sub // math.gcd(n, sub)
        for mult in (1, 2, 4, 8):
            cand = need * mult
            if cand <= sub and d % cand == 0 and (d // cand) >= 128:
                rp = cand
                break
    rows = n * rp
    cols = d // rp
    pr = pr.reshape(rows, cols)
    tg = tg.reshape(rows, cols)

    # --- Row tile: largest sublane-aligned tile dividing rows (few, tall steps).
    if rows % sub == 0:
        tr = sub
        while tr * 2 <= min(rows, 64) and rows % (tr * 2) == 0:
            tr *= 2
    else:
        tr = rows                       # full extent; layout-legal single tile
    row_tiles = rows // tr

    # --- Column tiling from a per-step DMA target and a VMEM budget.
    vmem_cap = _vmem_capacity_bytes()
    budget = int(0.70 * (vmem_cap - (4 << 20)))     # Mosaic-internal headroom

    if cols < 128:
        aw = td = cols                  # full-extent lane block; never masked
    else:
        cols128 = (cols // 128) * 128
        aw = min(512, max(128, ((8192 // tr) // 128) * 128), cols128)
        acc_bytes = 2 * tr * aw * 4
        in_budget = max(budget - acc_bytes - (2 << 20), 1 << 20)
        bytes_per_col = tr * (p_item + t_item)
        td_vmem = in_budget // (2 * bytes_per_col)      # double-buffered inputs
        td_target = max((8 << 20) // bytes_per_col, aw)  # ~8 MiB of HBM per step
        td = max(min(td_vmem, td_target, cols128), aw)
        td = (td // aw) * aw
    total_ct = pl.cdiv(cols, td)
    ragged = (cols % td) != 0

    # --- v7x: if rows give no parallelism, shard the reduced axis across TCs.
    n_shards = 1
    if _num_tensorcores() >= 2 and row_tiles == 1 and total_ct >= 2:
        n_shards = 2
    inner_ct = pl.cdiv(total_ct, n_shards)
    has_ghost = n_shards * inner_ct > total_ct
    ragged_k = ragged or has_ghost

    def in_map(s, ri, ci):
        gt = s * inner_ct + ci
        if has_ghost:
            # Ghost tile: reload the last valid tile; kernel masks it to zero.
            gt = jnp.minimum(gt, total_ct - 1)
        return (ri, gt)

    kernel = functools.partial(
        _dice_sums_kernel, p_exp=p_exp, cols=cols, td=td, aw=aw,
        inner_ct=inner_ct, ragged=ragged_k)

    inputs_vmem = 2 * tr * td * (p_item + t_item)   # 2 buffers x both streams
    acc_vmem = 2 * tr * aw * 4
    out_vmem = 2 * tr * 128 * 4
    working = inputs_vmem + acc_vmem + out_vmem
    vmem_limit = int(min(int(vmem_cap * 0.9),
                         max(working + (8 << 20), 32 << 20)))

    flops = 5 * rows * cols
    trans = 0 if isinstance(p_exp, int) else 2 * rows * cols
    cost = pl.CostEstimate(
        flops=int(flops), transcendentals=int(trans),
        bytes_accessed=int(rows * cols * (p_item + t_item)
                           + n_shards * rows * 128 * 4))

    out = pl.pallas_call(
        kernel,
        out_shape=jax.ShapeDtypeStruct((n_shards, rows, 128), jnp.float32),
        grid_spec=pltpu.PrefetchScalarGridSpec(
            num_scalar_prefetch=0,
            grid=(n_shards, row_tiles, inner_ct),
            in_specs=[
                pl.BlockSpec((tr, td), in_map),
                pl.BlockSpec((tr, td), in_map),
            ],
            out_specs=pl.BlockSpec((1, tr, 128), lambda s, ri, ci: (s, ri, 0)),
            scratch_shapes=[
                pltpu.VMEM((tr, aw), jnp.float32),
                pltpu.VMEM((tr, aw), jnp.float32),
            ],
        ),
        compiler_params=pltpu.CompilerParams(
            dimension_semantics=("parallel", "parallel", "arbitrary"),
            vmem_limit_bytes=vmem_limit),
        cost_estimate=cost,
    )(pr, tg)

    # Tiny final math in JAX: combine shards & packed sub-rows, smooth, reduce.
    num = out[:, :, 0].sum(axis=0).reshape(n, rp).sum(axis=1) + smooth
    den = out[:, :, 1].sum(axis=0).reshape(n, rp).sum(axis=1) + smooth
    loss = 1.0 - num / den

    if reduction == "mean":
        return loss.mean()
    if reduction == "sum":
        return loss.sum()
    return loss


def _reference(predict, target, smooth=1.0, p=2, reduction="mean"):
    n = predict.shape[0]
    pr = predict.reshape(n, -1).astype(jnp.float32)
    tg = target.reshape(n, -1).astype(jnp.float32)
    num = jnp.sum(pr * tg, axis=1) + smooth
    den = jnp.sum(pr ** p + tg ** p, axis=1) + smooth
    loss = 1.0 - num / den
    if reduction == "mean":
        return loss.mean()
    if reduction == "sum":
        return loss.sum()
    return loss


if __name__ == "__main__":
    key = jax.random.PRNGKey(0)
    k1, k2, k3, k4 = jax.random.split(key, 4)

    ok = True

    # Small NCHW-style input: batch=2, channels=4, spatial=16x16.
    predict = jax.nn.sigmoid(
        jax.random.normal(k1, (2, 4, 16, 16), dtype=jnp.float32))
    target = (jax.random.uniform(k2, (2, 4, 16, 16)) > 0.5).astype(jnp.float32)
    for red in ("mean", "sum", "none"):
        got = jax.block_until_ready(
            binary_dice_loss(predict, target, smooth=1.0, p=2, reduction=red))
        ref = _reference(predict, target, smooth=1.0, p=2, reduction=red)
        ok &= bool(jnp.allclose(got, ref, rtol=1e-5, atol=1e-5))

    # Ragged / multi-column-tile path (odd flattened size, non-multiple-of-8 rows).
    predict2 = jax.nn.sigmoid(
        jax.random.normal(k3, (4, 3, 37, 41), dtype=jnp.float32))
    target2 = (jax.random.uniform(k4, (4, 3, 37, 41)) > 0.5).astype(jnp.float32)
    got2 = jax.block_until_ready(
        binary_dice_loss(predict2, target2, smooth=1.0, p=2, reduction="none"))
    ref2 = _reference(predict2, target2, smooth=1.0, p=2, reduction="none")
    ok &= bool(jnp.allclose(got2, ref2, rtol=1e-5, atol=1e-5))

    if ok:
        print("KERNEL_OK")
    else:
        print("MISMATCH")
</pallas_src>

<mosaic_0001>
module attributes {stable_mosaic.version = 11 : i64} {
  func.func @_dice_sums_kernel(%arg0: i32, %arg1: i32, %arg2: i32, %arg3: memref<8x256xf32, #tpu.memory_space<vmem>>, %arg4: memref<8x256xf32, #tpu.memory_space<vmem>>, %arg5: memref<1x8x128xf32, #tpu.memory_space<vmem>>, %arg6: memref<8x256xf32, #tpu.memory_space<vmem>>, %arg7: memref<8x256xf32, #tpu.memory_space<vmem>>) attributes {dimension_semantics = [#tpu.dimension_semantics<parallel>, #tpu.dimension_semantics<parallel>, #tpu.dimension_semantics<arbitrary>], iteration_bounds = array<i64: 1, 1, 1>, scalar_prefetch = 0 : i64, scratch_operands = 2 : i64, tpu.core_type = #tpu.core_type<tc>, window_params = [{transform_indices = @transform_0, window_bounds = array<i64: 8, 256>}, {transform_indices = @transform_1, window_bounds = array<i64: 8, 256>}, {transform_indices = @transform_2, window_bounds = array<i64: 1, 8, 128>}]} {
    %c0_i32 = arith.constant 0 : i32
    %0 = arith.cmpi eq, %arg2, %c0_i32 : i32
    %1 = arith.extui %0 : i1 to i32
    %c0_i32_0 = arith.constant 0 : i32
    %2 = arith.cmpi ne, %1, %c0_i32_0 : i32
    scf.if %2 {
      %cst_15 = arith.constant 0.000000e+00 : f32
      %22 = vector.broadcast %cst_15 : f32 to vector<8x256xf32>
      %c0_16 = arith.constant 0 : index
      %c0_17 = arith.constant 0 : index
      %23 = vector.load %arg6[%c0_16, %c0_17] : memref<8x256xf32, #tpu.memory_space<vmem>>, vector<8x256xf32>
      tpu.vector_store %arg6[%c0_16, %c0_17], %22 {strides = array<i32>} : memref<8x256xf32, #tpu.memory_space<vmem>>, vector<8x256xf32>,
      %cst_18 = arith.constant 0.000000e+00 : f32
      %24 = vector.broadcast %cst_18 : f32 to vector<8x256xf32>
      %c0_19 = arith.constant 0 : index
      %c0_20 = arith.constant 0 : index
      %25 = vector.load %arg7[%c0_19, %c0_20] : memref<8x256xf32, #tpu.memory_space<vmem>>, vector<8x256xf32>
      tpu.vector_store %arg7[%c0_19, %c0_20], %24 {strides = array<i32>} : memref<8x256xf32, #tpu.memory_space<vmem>>, vector<8x256xf32>,
    } else {
    }
    %cst = arith.constant 0.000000e+00 : f32
    %3 = vector.broadcast %cst : f32 to vector<8x256xf32>
    %cst_1 = arith.constant 0.000000e+00 : f32
    %4 = vector.broadcast %cst_1 : f32 to vector<8x256xf32>
    %c0 = arith.constant 0 : index
    %c0_2 = arith.constant 0 : index
    %5 = vector.load %arg3[%c0, %c0_2] : memref<8x256xf32, #tpu.memory_space<vmem>>, vector<8x256xf32>
    %c0_3 = arith.constant 0 : index
    %c0_4 = arith.constant 0 : index
    %6 = vector.load %arg4[%c0_3, %c0_4] : memref<8x256xf32, #tpu.memory_space<vmem>>, vector<8x256xf32>
    %7 = arith.mulf %5, %6 : vector<8x256xf32>
    %8 = arith.mulf %5, %5 : vector<8x256xf32>
    %9 = arith.mulf %6, %6 : vector<8x256xf32>
    %10 = arith.addf %8, %9 : vector<8x256xf32>
    %11 = arith.addf %3, %7 : vector<8x256xf32>
    %12 = arith.addf %4, %10 : vector<8x256xf32>
    %c0_5 = arith.constant 0 : index
    %c0_6 = arith.constant 0 : index
    %13 = vector.load %arg6[%c0_5, %c0_6] : memref<8x256xf32, #tpu.memory_space<vmem>>, vector<8x256xf32>
    %14 = arith.addf %13, %11 : vector<8x256xf32>
    %c0_7 = arith.constant 0 : index
    %c0_8 = arith.constant 0 : index
    %15 = vector.load %arg6[%c0_7, %c0_8] : memref<8x256xf32, #tpu.memory_space<vmem>>, vector<8x256xf32>
    tpu.vector_store %arg6[%c0_7, %c0_8], %14 {strides = array<i32>} : memref<8x256xf32, #tpu.memory_space<vmem>>, vector<8x256xf32>,
    %c0_9 = arith.constant 0 : index
    %c0_10 = arith.constant 0 : index
    %16 = vector.load %arg7[%c0_9, %c0_10] : memref<8x256xf32, #tpu.memory_space<vmem>>, vector<8x256xf32>
    %17 = arith.addf %16, %12 : vector<8x256xf32>
    %c0_11 = arith.constant 0 : index
    %c0_12 = arith.constant 0 : index
    %18 = vector.load %arg7[%c0_11, %c0_12] : memref<8x256xf32, #tpu.memory_space<vmem>>, vector<8x256xf32>
    tpu.vector_store %arg7[%c0_11, %c0_12], %17 {strides = array<i32>} : memref<8x256xf32, #tpu.memory_space<vmem>>, vector<8x256xf32>,
    %c0_i32_13 = arith.constant 0 : i32
    %19 = arith.cmpi eq, %arg2, %c0_i32_13 : i32
    %20 = arith.extui %19 : i1 to i32
    %c0_i32_14 = arith.constant 0 : i32
    %21 = arith.cmpi ne, %20, %c0_i32_14 : i32
    scf.if %21 {
      %c0_15 = arith.constant 0 : index
      %c0_16 = arith.constant 0 : index
      %22 = vector.load %arg6[%c0_15, %c0_16] : memref<8x256xf32, #tpu.memory_space<vmem>>, vector<8x256xf32>
      %cst_17 = arith.constant dense<0.000000e+00> : vector<8xf32>
      %23 = vector.multi_reduction <add>, %22, %cst_17 [1] : vector<8x256xf32> to vector<8xf32>
      %24 = vector.shape_cast %23 : vector<8xf32> to vector<8x1xf32>
      %c0_18 = arith.constant 0 : index
      %c0_19 = arith.constant 0 : index
      %25 = vector.load %arg7[%c0_18, %c0_19] : memref<8x256xf32, #tpu.memory_space<vmem>>, vector<8x256xf32>
      %cst_20 = arith.constant dense<0.000000e+00> : vector<8xf32>
      %26 = vector.multi_reduction <add>, %25, %cst_20 [1] : vector<8x256xf32> to vector<8xf32>
      %27 = vector.shape_cast %26 : vector<8xf32> to vector<8x1xf32>
      %28 = tpu.iota {dimensions = array<i32: 1>} : vector<8x128xi32>
      %c0_i32_21 = arith.constant 0 : i32
      %29 = vector.broadcast %c0_i32_21 : i32 to vector<8x128xi32>
      %30 = arith.cmpi eq, %28, %29 : vector<8x128xi32>
      %c1_i32 = arith.constant 1 : i32
      %31 = vector.broadcast %c1_i32 : i32 to vector<8x128xi32>
      %32 = arith.cmpi eq, %28, %31 : vector<8x128xi32>
      %cst_22 = arith.constant 0.000000e+00 : f32
      %33 = vector.shape_cast %27 : vector<8x1xf32> to vector<8x1xf32>
      %34 = vector.broadcast %33 : vector<8x1xf32> to vector<8x128xf32>
      %35 = vector.broadcast %cst_22 : f32 to vector<8x128xf32>
      %36 = arith.select %32, %34, %35 : vector<8x128xi1>, vector<8x128xf32>
      %37 = vector.shape_cast %24 : vector<8x1xf32> to vector<8x1xf32>
      %38 = vector.broadcast %37 : vector<8x1xf32> to vector<8x128xf32>
      %39 = arith.select %30, %38, %36 : vector<8x128xi1>, vector<8x128xf32>
      %40 = vector.shape_cast %39 : vector<8x128xf32> to vector<1x8x128xf32>
      %c0_23 = arith.constant 0 : index
      %c0_24 = arith.constant 0 : index
      %c0_25 = arith.constant 0 : index
      %41 = vector.load %arg5[%c0_23, %c0_24, %c0_25] : memref<1x8x128xf32, #tpu.memory_space<vmem>>, vector<1x8x128xf32>
      tpu.vector_store %arg5[%c0_23, %c0_24, %c0_25], %40 {strides = array<i32>} : memref<1x8x128xf32, #tpu.memory_space<vmem>>, vector<1x8x128xf32>,
    } else {
    }
    return
  }
  func.func @transform_0(%arg0: i32, %arg1: i32, %arg2: i32) -> (i32, i32) {
    %c1_i32 = arith.constant 1 : i32
    %0 = arith.muli %arg0, %c1_i32 : i32
    %1 = arith.addi %0, %arg2 : i32
    %c0_i32 = arith.constant 0 : i32
    return %arg1, %1 : i32, i32
  }
  func.func @transform_1(%arg0: i32, %arg1: i32, %arg2: i32) -> (i32, i32) {
    %c1_i32 = arith.constant 1 : i32
    %0 = arith.muli %arg0, %c1_i32 : i32
    %1 = arith.addi %0, %arg2 : i32
    %c0_i32 = arith.constant 0 : i32
    return %arg1, %1 : i32, i32
  }
  func.func @transform_2(%arg0: i32, %arg1: i32, %arg2: i32) -> (i32, i32, i32) {
    %c0_i32 = arith.constant 0 : i32
    %c0_i32_0 = arith.constant 0 : i32
    return %arg0, %arg1, %c0_i32 : i32, i32, i32
  }
}

</mosaic_0001>

<llo_original>
// kernel: tpu_custom_call.1
$region0: #{tpu_custom_call.1}
  #allocation0 [shape = 'u32[]', space=smem, size = 0x4, offset = 0x4, fixed_abs, tag = 'smem constant byte address 0x4 - core index']
  #allocation1 [shape = 'u32[144,128]{1,0:T(1,128)}', space=vmem, size = 0x12000, scoped, tag = 'internal scratch']
  #allocation2 [shape = 'f32[8,256]{1,0:T(8,128)}', space=vmem, size = 0x2000, scoped, tag = 'scratch operand']
  #allocation3 [shape = 'f32[8,256]{1,0:T(8,128)}', space=vmem, size = 0x2000, scoped, tag = 'scratch operand']
  %s0 = inlined_call_operand.hbm [shape: f32[8,256], index: 0, kind: input, shape index: {}]
  %s1 = inlined_call_operand.hbm [shape: f32[8,256], index: 1, kind: input, shape index: {}]
  %s2 = inlined_call_operand.hbm [shape: f32[1,8,128], index: 2, kind: output, shape index: {}]
  %s3 = sld [smem:[#allocation0]]
  $region34: #{tpu_custom_call.1} parent=0
    _
  %s5 = ssub.s32 1, %s3
  %s6 = scalar_select 0, %s5, %s3
  $region1: #{tpu_custom_call.1} parent=0
    #allocation4 [shape = 'u8[8192]{0}', space=vmem, size = 0x2000, scoped, tag = 'input window, operand 0, single buffered']
    #allocation5 [shape = 's32[1]{0}', space=sflag, size = 0x4, scoped, tag = 'scoped memory for tpu_custom_call.1']
    #allocation6 [shape = 's32[1]{0}', space=sflag, size = 0x4, scoped, tag = 'scoped memory for tpu_custom_call.1']
    #allocation7 [shape = 'u8[8192]{0}', space=vmem, size = 0x2000, scoped, tag = 'input window, operand 1, single buffered']
    #allocation8 [shape = 's32[1]{0}', space=sflag, size = 0x4, scoped, tag = 'scoped memory for tpu_custom_call.1']
    #allocation9 [shape = 'u8[4096]{0}', space=vmem, size = 0x1000, scoped, tag = 'output window, operand 0, single buffered']
    %7 = vsyncpa [#allocation5], 0
    %8 = vsyncpa [#allocation8], 0
    %9 = vsyncpa [#allocation6], 0
    // Predicated region
    $region2: #{tpu_custom_call.1} parent=1 // pred_check
      _
    $region3: #{tpu_custom_call.1} parent=1 // pred_check_branch
      %11 = sbr.rel (0) target = $region5
    $region4: #{tpu_custom_call.1} parent=1 // pred_region
      %s12 = sadd.s32 0, 0
      %s13 = smul.u32 2, %s12
      %s15 = ssub.s32 256, 256
      %16 = vsyncadd [#allocation5], %s15
      %s17 = smul.addr %s13, 128
      %s18 = scalar_lea.hbm %s0, %s17
      %s20 = sshll.u32 [#allocation4], 4
      %s21 = int_to_ptr.vmem [resolvable:$true] %s20
      %23 = dma.hbm_to_vmem [thread:$0]  %s18, 256, %s21, [#allocation5]
    $region5: #{tpu_custom_call.1} parent=1 // pred_fallthru
      _
    // Predicated region
    $region6: #{tpu_custom_call.1} parent=1 // pred_check
      _
    $region7: #{tpu_custom_call.1} parent=1 // pred_check_branch
      %25 = sbr.rel (0) target = $region9
    $region8: #{tpu_custom_call.1} parent=1 // pred_region
      %s26 = sadd.s32 0, 0
      %s27 = smul.u32 2, %s26
      %s29 = ssub.s32 256, 256
      %30 = vsyncadd [#allocation8], %s29
      %s31 = smul.addr %s27, 128
      %s32 = scalar_lea.hbm %s1, %s31
      %s34 = sshll.u32 [#allocation7], 4
      %s35 = int_to_ptr.vmem [resolvable:$true] %s34
      %37 = dma.hbm_to_vmem [thread:$0]  %s32, 256, %s35, [#allocation8]
    $region9: #{tpu_custom_call.1} parent=1 // pred_fallthru
      _
    // Predicated region
    $region10: #{tpu_custom_call.1} parent=1 // pred_check
      _
    $region11: #{tpu_custom_call.1} parent=1 // pred_check_branch
      %39 = sbr.rel (0) target = $region13
    $region12: #{tpu_custom_call.1} parent=1 // pred_region
      %40 = dma.done [#allocation5], 256
    $region13: #{tpu_custom_call.1} parent=1 // pred_fallthru
      _
    // Predicated region
    $region14: #{tpu_custom_call.1} parent=1 // pred_check
      _
    $region15: #{tpu_custom_call.1} parent=1 // pred_check_branch
      %42 = sbr.rel (0) target = $region17
    $region16: #{tpu_custom_call.1} parent=1 // pred_region
      %43 = dma.done [#allocation8], 256
    $region17: #{tpu_custom_call.1} parent=1 // pred_fallthru
      _
    %s44 = sadd.s32 0, 0
    %s45 = smul.u32 2, %s44
    %s46 = sadd.s32 0, 0
    %s47 = smul.u32 2, %s46
    %p48 = scmp.eq.s32.totalorder 0, 0
    // Predicated region
    $region18: #{tpu_custom_call.1} parent=1 // pred_check
      %p49 = pneg %p48
    $region19: #{tpu_custom_call.1} parent=1 // pred_check_branch
      %51 = sbr.rel (%p49) target = $region21
    $region20: #{tpu_custom_call.1} parent=1 // pred_region
      %52 = vst [vmem:[#allocation2] sm:$0xff] 0.0
      %53 = vst [vmem:[#allocation2 + $0x8] sm:$0xff] 0.0
      %54 = vst [vmem:[#allocation3] sm:$0xff] 0.0
      %55 = vst [vmem:[#allocation3 + $0x8] sm:$0xff] 0.0
    $region21: #{tpu_custom_call.1} parent=1 // pred_fallthru
      _
    %v56 = vld [vmem:[#allocation4] sm:$0xff]
    %v57 = vld [vmem:[#allocation4 + $0x8] sm:$0xff]
    %v58 = vld [vmem:[#allocation7] sm:$0xff]
    %v59 = vld [vmem:[#allocation7 + $0x8] sm:$0xff]
    %v60 = vmul.f32 %v56, %v58
    %v61 = vmul.f32 %v57, %v59
    %v62 = vmul.f32 %v56, %v56
    %v63 = vmul.f32 %v57, %v57
    %v64 = vmul.f32 %v58, %v58
    %v65 = vmul.f32 %v59, %v59
    %v66 = vadd.f32 %v62, %v64
    %v67 = vadd.f32 %v63, %v65
    %v68 = vadd.f32 %v60, 0.0
    %v69 = vadd.f32 %v61, 0.0
    %v70 = vadd.f32 %v66, 0.0
    %v71 = vadd.f32 %v67, 0.0
    %v72 = vld [vmem:[#allocation2] sm:$0xff]
    %v73 = vld [vmem:[#allocation2 + $0x8] sm:$0xff]
    %v74 = vadd.f32 %v72, %v68
    %v75 = vadd.f32 %v73, %v69
    %76 = vst [vmem:[#allocation2] sm:$0xff] %v74
    %77 = vst [vmem:[#allocation2 + $0x8] sm:$0xff] %v75
    %v78 = vld [vmem:[#allocation3] sm:$0xff]
    %v79 = vld [vmem:[#allocation3 + $0x8] sm:$0xff]
    %v80 = vadd.f32 %v78, %v70
    %v81 = vadd.f32 %v79, %v71
    %82 = vst [vmem:[#allocation3] sm:$0xff] %v80
    %83 = vst [vmem:[#allocation3 + $0x8] sm:$0xff] %v81
    // Predicated region
    $region22: #{tpu_custom_call.1} parent=1 // pred_check
      %p84 = pneg %p48
    $region23: #{tpu_custom_call.1} parent=1 // pred_check_branch
      %86 = sbr.rel (%p84) target = $region25
    $region24: #{tpu_custom_call.1} parent=1 // pred_region
      %v87 = vld [vmem:[#allocation2] sm:$0xff]
      %v88 = vld [vmem:[#allocation2 + $0x8] sm:$0xff]
      %v89 = vadd.f32 %v87, %v88
      %90 = vadd.xlane.f32.xlu0 %v89
      %v91 = vpop.xlane.xlu0 %90
      %v92 = vld [vmem:[#allocation3] sm:$0xff]
      %v93 = vld [vmem:[#allocation3 + $0x8] sm:$0xff]
      %v94 = vadd.f32 %v92, %v93
      %95 = vadd.xlane.f32.xlu0 %v94
      %v96 = vpop.xlane.xlu0 %95
      %v97 = vlaneseq
      %v98 = vand.u32 %v97, 127
      %vm99 = vcmp.eq.s32.totalorder %v98, 0
      %vm100 = vcmp.eq.s32.totalorder %v98, 1
      %v101 = vsel %vm100, %v96, 0.0
      %v102 = vsel %vm99, %v91, %v101
      %103 = vst [vmem:[#allocation9] sm:$0xff] %v102
    $region25: #{tpu_custom_call.1} parent=1 // pred_fallthru
      _
    // Predicated region
    $region26: #{tpu_custom_call.1} parent=1 // pred_check
      _
    $region27: #{tpu_custom_call.1} parent=1 // pred_check_branch
      %105 = sbr.rel (0) target = $region29
    $region28: #{tpu_custom_call.1} parent=1 // pred_region
      %s107 = ssub.s32 128, 128
      %108 = vsyncadd [#allocation6], %s107
      %s110 = sshll.u32 [#allocation9], 4
      %s111 = int_to_ptr.vmem [resolvable:$true] %s110
      %113 = dma.vmem_to_hbm [thread:$0]  %s111, 128, %s2, [#allocation6]
    $region29: #{tpu_custom_call.1} parent=1 // pred_fallthru
      _
    // Predicated region
    $region30: #{tpu_custom_call.1} parent=1 // pred_check
      _
    $region31: #{tpu_custom_call.1} parent=1 // pred_check_branch
      %115 = sbr.rel (0) target = $region33
    $region32: #{tpu_custom_call.1} parent=1 // pred_region
      %116 = dma.done [#allocation6], 128
    $region33: #{tpu_custom_call.1} parent=1 // pred_fallthru
      _
    %117 = vsyncpa [#allocation5], 1
    %118 = vsyncpa [#allocation8], 1
    %119 = vsyncpa [#allocation6], 1

</llo_original>
